<compile_context>
chip_gen: v7x
topology: tpu7x:2x2x1
jax: 0.10.0
libtpu: 0.0.40
codegen_flags: <defaults>
</compile_context>

<pallas_src>
import functools

import jax
import jax.numpy as jnp
from jax.experimental import pallas as pl
from jax.experimental.pallas import tpu as pltpu


def _mgemhpp_kernel(p_ref, x_ref, o_ref, *, split_param, eps):
    """One (tn, tc) tile of the batch/channel grid.

    p_ref : SMEM (m,) f32       -- per-head GeM exponents
    x_ref : VMEM (tn, h, w, tc) -- channels on the lane axis (lane-dense)
    o_ref : VMEM (tn, m, tc)    -- lane-dense output, one sublane row per head
    """
    w = x_ref.shape[2]
    x = x_ref[...].astype(jnp.float32)          # single load of the block, f32 math

    start = 0
    for i, h_i in enumerate(split_param):       # static loop; split_param is compile-time
        p_i = p_ref[i]                          # scalar read from SMEM (once per segment)
        inv_p_i = 1.0 / p_i
        seg = x[:, start:start + h_i, :, :]     # (tn, h_i, w, tc): slice on a non-minor dim
        seg = jnp.maximum(seg, eps)             # clamp(min=eps)
        seg_p = seg ** p_i                      # EUP log+exp, lane-dense in c
        pooled = jnp.sum(seg_p, axis=(1, 2)) * (1.0 / (h_i * w))   # mean over (h_i, w)
        o_ref[:, i, :] = (pooled ** inv_p_i).astype(o_ref.dtype)   # write head i directly
        start += h_i


def mgemhpp(x, p, split_param, *, eps=1e-6):
    """x: [n, c, h, w], p: [m] per-head exponents, split_param: ints summing to h.

    Returns [n, c, m], matching MGeMHPP.forward.
    """
    n, c, h, w = x.shape
    split_param = tuple(int(s) for s in split_param)
    m = len(split_param)
    assert sum(split_param) == h
    assert p.shape == (m,)

    # Lane-dense layout: channels on the lane axis (c is typically 128-512 in HSTL
    # while w is 11-64). The transposes are cheap layout plumbing on the XLA side.
    x_t = jnp.transpose(x, (0, 2, 3, 1))        # (n, h, w, c)

    itemsize = jnp.dtype(x.dtype).itemsize
    # Channel tile: full c when small, otherwise lane-aligned 128-wide tiles.
    tc = c if c <= 128 else 128
    # Batch tile sized so one input block is ~4 MiB: big enough to amortize the
    # ~0.35 us per-step overhead, small enough that double-buffered input plus
    # the in-kernel f32 temporaries fit v7x's 64 MiB VMEM.
    bytes_per_n = h * w * tc * itemsize
    tn = max(1, min(n, (4 * 1024 * 1024) // max(1, bytes_per_n)))
    block_bytes = tn * bytes_per_n
    vmem_limit = int(min(48 * 1024 * 1024, max(16 * 1024 * 1024, 8 * block_bytes)))

    kernel = functools.partial(_mgemhpp_kernel, split_param=split_param, eps=eps)

    grid = (pl.cdiv(n, tn), pl.cdiv(c, tc))

    out_t = pl.pallas_call(
        kernel,
        out_shape=jax.ShapeDtypeStruct((n, m, c), x.dtype),
        grid=grid,
        in_specs=[
            pl.BlockSpec(memory_space=pltpu.MemorySpace.SMEM),        # p (per-head scalars)
            pl.BlockSpec((tn, h, w, tc), lambda i, j: (i, 0, 0, j)),  # x tile
        ],
        out_specs=pl.BlockSpec((tn, m, tc), lambda i, j: (i, 0, j)),
        compiler_params=pltpu.CompilerParams(
            dimension_semantics=("parallel", "parallel"),
            vmem_limit_bytes=vmem_limit,
        ),
    )(p.astype(jnp.float32), x_t)

    return jnp.transpose(out_t, (0, 2, 1))      # (n, c, m)


def mgemhpp_ref(x, p, split_param):
    """Pure-JAX reference mirroring the PyTorch forward (per-head p)."""
    eps = 1e-6
    feats = []
    start = 0
    for i, h_i in enumerate(split_param):
        seg = x[:, :, start:start + h_i, :]
        n, c = seg.shape[:2]
        z = seg.reshape(n, c, 1, -1)
        z = jnp.mean(jnp.maximum(z, eps) ** p[i], axis=-1) ** (1.0 / p[i])  # (n, c, 1)
        feats.append(z)
        start += h_i
    return jnp.concatenate(feats, axis=-1)


if __name__ == "__main__":
    key = jax.random.PRNGKey(0)

    n, c, h, w = 2, 4, 16, 16
    split_param = [4, 4, 8]          # sums to h=16, m=3 heads
    m = len(split_param)

    x = jax.random.normal(key, (n, c, h, w), dtype=jnp.float32)
    # deterministic parameter init: each GeMHPP has nn.Parameter(torch.ones(1) * 6.5)
    p = jnp.ones((m,), dtype=jnp.float32) * 6.5

    out = mgemhpp(x, p, split_param)
    out = jax.block_until_ready(out)

    ref = mgemhpp_ref(x, p, split_param)
    assert out.shape == (n, c, m)
    assert jnp.allclose(out, ref, rtol=1e-4, atol=1e-5), (out, ref)

    print("KERNEL_OK")
</pallas_src>

<mosaic_0001>
module attributes {stable_mosaic.version = 11 : i64} {
  func.func @_mgemhpp_kernel(%arg0: i32, %arg1: i32, %arg2: memref<3xf32, #tpu.memory_space<smem>>, %arg3: memref<2x16x16x4xf32, #tpu.memory_space<vmem>>, %arg4: memref<2x3x4xf32, #tpu.memory_space<vmem>>) attributes {dimension_semantics = [#tpu.dimension_semantics<parallel>, #tpu.dimension_semantics<parallel>], iteration_bounds = array<i64: 1, 1>, scalar_prefetch = 0 : i64, scratch_operands = 0 : i64, tpu.core_type = #tpu.core_type<tc>, window_params = [{transform_indices = @transform_0, window_bounds = array<i64: 3>}, {transform_indices = @transform_1, window_bounds = array<i64: 2, 16, 16, 4>}, {transform_indices = @transform_2, window_bounds = array<i64: 2, 3, 4>}]} {
    %c0 = arith.constant 0 : index
    %c0_0 = arith.constant 0 : index
    %c0_1 = arith.constant 0 : index
    %c0_2 = arith.constant 0 : index
    %0 = vector.load %arg3[%c0, %c0_0, %c0_1, %c0_2] : memref<2x16x16x4xf32, #tpu.memory_space<vmem>>, vector<2x16x16x4xf32>
    %c0_3 = arith.constant 0 : index
    %1 = memref.load %arg2[%c0_3] : memref<3xf32, #tpu.memory_space<smem>>
    %cst = arith.constant 1.000000e+00 : f32
    %2 = arith.divf %cst, %1 : f32
    %3 = vector.extract_strided_slice %0 {offsets = [0, 0, 0, 0], sizes = [2, 4, 16, 4], strides = [1, 1, 1, 1]} : vector<2x16x16x4xf32> to vector<2x4x16x4xf32>
    %cst_4 = arith.constant 9.99999997E-7 : f32
    %4 = vector.broadcast %cst_4 : f32 to vector<2x4x16x4xf32>
    %5 = arith.maximumf %3, %4 : vector<2x4x16x4xf32>
    %6 = vector.broadcast %1 : f32 to vector<2x4x16x4xf32>
    %7 = math.powf %5, %6 : vector<2x4x16x4xf32>
    %cst_5 = arith.constant dense<0.000000e+00> : vector<2x4xf32>
    %8 = vector.multi_reduction <add>, %7, %cst_5 [1, 2] : vector<2x4x16x4xf32> to vector<2x4xf32>
    %cst_6 = arith.constant 1.562500e-02 : f32
    %9 = vector.broadcast %cst_6 : f32 to vector<2x4xf32>
    %10 = arith.mulf %8, %9 : vector<2x4xf32>
    %11 = vector.broadcast %2 : f32 to vector<2x4xf32>
    %12 = math.powf %10, %11 : vector<2x4xf32>
    %c0_7 = arith.constant 0 : index
    %c0_8 = arith.constant 0 : index
    %c0_9 = arith.constant 0 : index
    %13 = vector.load %arg4[%c0_7, %c0_8, %c0_9] : memref<2x3x4xf32, #tpu.memory_space<vmem>>, vector<2x1x4xf32>
    %14 = vector.shape_cast %13 : vector<2x1x4xf32> to vector<2x4xf32>
    %15 = vector.shape_cast %12 : vector<2x4xf32> to vector<2x1x4xf32>
    tpu.vector_store %arg4[%c0_7, %c0_8, %c0_9], %15 {strides = array<i32>} : memref<2x3x4xf32, #tpu.memory_space<vmem>>, vector<2x1x4xf32>,
    %c1 = arith.constant 1 : index
    %16 = memref.load %arg2[%c1] : memref<3xf32, #tpu.memory_space<smem>>
    %cst_10 = arith.constant 1.000000e+00 : f32
    %17 = arith.divf %cst_10, %16 : f32
    %18 = vector.extract_strided_slice %0 {offsets = [0, 4, 0, 0], sizes = [2, 4, 16, 4], strides = [1, 1, 1, 1]} : vector<2x16x16x4xf32> to vector<2x4x16x4xf32>
    %cst_11 = arith.constant 9.99999997E-7 : f32
    %19 = vector.broadcast %cst_11 : f32 to vector<2x4x16x4xf32>
    %20 = arith.maximumf %18, %19 : vector<2x4x16x4xf32>
    %21 = vector.broadcast %16 : f32 to vector<2x4x16x4xf32>
    %22 = math.powf %20, %21 : vector<2x4x16x4xf32>
    %cst_12 = arith.constant dense<0.000000e+00> : vector<2x4xf32>
    %23 = vector.multi_reduction <add>, %22, %cst_12 [1, 2] : vector<2x4x16x4xf32> to vector<2x4xf32>
    %cst_13 = arith.constant 1.562500e-02 : f32
    %24 = vector.broadcast %cst_13 : f32 to vector<2x4xf32>
    %25 = arith.mulf %23, %24 : vector<2x4xf32>
    %26 = vector.broadcast %17 : f32 to vector<2x4xf32>
    %27 = math.powf %25, %26 : vector<2x4xf32>
    %c0_14 = arith.constant 0 : index
    %c1_15 = arith.constant 1 : index
    %c0_16 = arith.constant 0 : index
    %28 = vector.load %arg4[%c0_14, %c1_15, %c0_16] : memref<2x3x4xf32, #tpu.memory_space<vmem>>, vector<2x1x4xf32>
    %29 = vector.shape_cast %28 : vector<2x1x4xf32> to vector<2x4xf32>
    %30 = vector.shape_cast %27 : vector<2x4xf32> to vector<2x1x4xf32>
    tpu.vector_store %arg4[%c0_14, %c1_15, %c0_16], %30 {strides = array<i32>} : memref<2x3x4xf32, #tpu.memory_space<vmem>>, vector<2x1x4xf32>,
    %c2 = arith.constant 2 : index
    %31 = memref.load %arg2[%c2] : memref<3xf32, #tpu.memory_space<smem>>
    %cst_17 = arith.constant 1.000000e+00 : f32
    %32 = arith.divf %cst_17, %31 : f32
    %33 = vector.extract_strided_slice %0 {offsets = [0, 8, 0, 0], sizes = [2, 8, 16, 4], strides = [1, 1, 1, 1]} : vector<2x16x16x4xf32> to vector<2x8x16x4xf32>
    %cst_18 = arith.constant 9.99999997E-7 : f32
    %34 = vector.broadcast %cst_18 : f32 to vector<2x8x16x4xf32>
    %35 = arith.maximumf %33, %34 : vector<2x8x16x4xf32>
    %36 = vector.broadcast %31 : f32 to vector<2x8x16x4xf32>
    %37 = math.powf %35, %36 : vector<2x8x16x4xf32>
    %cst_19 = arith.constant dense<0.000000e+00> : vector<2x4xf32>
    %38 = vector.multi_reduction <add>, %37, %cst_19 [1, 2] : vector<2x8x16x4xf32> to vector<2x4xf32>
    %cst_20 = arith.constant 7.812500e-03 : f32
    %39 = vector.broadcast %cst_20 : f32 to vector<2x4xf32>
    %40 = arith.mulf %38, %39 : vector<2x4xf32>
    %41 = vector.broadcast %32 : f32 to vector<2x4xf32>
    %42 = math.powf %40, %41 : vector<2x4xf32>
    %c0_21 = arith.constant 0 : index
    %c2_22 = arith.constant 2 : index
    %c0_23 = arith.constant 0 : index
    %43 = vector.load %arg4[%c0_21, %c2_22, %c0_23] : memref<2x3x4xf32, #tpu.memory_space<vmem>>, vector<2x1x4xf32>
    %44 = vector.shape_cast %43 : vector<2x1x4xf32> to vector<2x4xf32>
    %45 = vector.shape_cast %42 : vector<2x4xf32> to vector<2x1x4xf32>
    tpu.vector_store %arg4[%c0_21, %c2_22, %c0_23], %45 {strides = array<i32>} : memref<2x3x4xf32, #tpu.memory_space<vmem>>, vector<2x1x4xf32>,
    return
  }
  func.func @transform_0(%arg0: i32, %arg1: i32) -> i32 {
    %c0_i32 = arith.constant 0 : i32
    %c0_i32_0 = arith.constant 0 : i32
    return %c0_i32 : i32
  }
  func.func @transform_1(%arg0: i32, %arg1: i32) -> (i32, i32, i32, i32) {
    %c0_i32 = arith.constant 0 : i32
    %c0_i32_0 = arith.constant 0 : i32
    %c0_i32_1 = arith.constant 0 : i32
    return %arg0, %c0_i32, %c0_i32_0, %arg1 : i32, i32, i32, i32
  }
  func.func @transform_2(%arg0: i32, %arg1: i32) -> (i32, i32, i32) {
    %c0_i32 = arith.constant 0 : i32
    %c0_i32_0 = arith.constant 0 : i32
    return %arg0, %c0_i32, %arg1 : i32, i32, i32
  }
}

</mosaic_0001>

<llo_original>
// kernel: tpu_custom_call.1
$region0: #{tpu_custom_call.1}
  #allocation0 [shape = 'u32[]', space=smem, size = 0x4, offset = 0x4, fixed_abs, tag = 'smem constant byte address 0x4 - core index']
  #allocation1 [shape = 'u32[144,128]{1,0:T(1,128)}', space=vmem, size = 0x12000, scoped, tag = 'internal scratch']
  %s0 = inlined_call_operand.vmem [shape: f32[3], index: 0, kind: input, shape index: {}]
  %s1 = inlined_call_operand.vmem [shape: f32[2,16,16,4], index: 1, kind: input, shape index: {}]
  %s2 = inlined_call_operand.vmem [shape: f32[2,3,4], index: 2, kind: output, shape index: {}]
  %s3 = sld [smem:[#allocation0]]
  $region22: #{tpu_custom_call.1} parent=0
    _
  %s5 = ssub.s32 1, %s3
  %s6 = scalar_select 0, %s5, %s3
  $region1: #{tpu_custom_call.1} parent=0
    #allocation2 [shape = 'u8[512]{0}', space=smem, size = 0x200, scoped, tag = 'input window, operand 0, single buffered']
    #allocation3 [shape = 's32[1]{0}', space=sflag, size = 0x4, scoped, tag = 'scoped memory for tpu_custom_call.1']
    %7 = vsyncpa [#allocation3], 0
    // Predicated region
    $region2: #{tpu_custom_call.1} parent=1 // pred_check
      _
    $region3: #{tpu_custom_call.1} parent=1 // pred_check_branch
      %9 = sbr.rel (0) target = $region5
    $region4: #{tpu_custom_call.1} parent=1 // pred_region
      %s11 = ssub.s32 16, 16
      %12 = vsyncadd [#allocation3], %s11
      %s14 = sshll.u32 %s0, 4
      %s15 = int_to_ptr.vmem [resolvable:$true] %s14
      %17 = dma.vmem_to_smem %s15, 16, [#allocation2], [#allocation3]
    $region5: #{tpu_custom_call.1} parent=1 // pred_fallthru
      _
    // Predicated region
    $region6: #{tpu_custom_call.1} parent=1 // pred_check
      _
    $region7: #{tpu_custom_call.1} parent=1 // pred_check_branch
      %19 = sbr.rel (0) target = $region9
    $region8: #{tpu_custom_call.1} parent=1 // pred_region
      _
    $region9: #{tpu_custom_call.1} parent=1 // pred_fallthru
      _
    // Predicated region
    $region10: #{tpu_custom_call.1} parent=1 // pred_check
      _
    $region11: #{tpu_custom_call.1} parent=1 // pred_check_branch
      %21 = sbr.rel (0) target = $region13
    $region12: #{tpu_custom_call.1} parent=1 // pred_region
      %22 = dma.done [#allocation3], 16
    $region13: #{tpu_custom_call.1} parent=1 // pred_fallthru
      _
    %23 = sfence
    %v24 = vld [vmem:[%s1] sm:$0xff]
    %v25 = vld [vmem:[%s1 + $0x8] sm:$0xff]
    %v26 = vld [vmem:[%s1 + $0x10] sm:$0xff]
    %v27 = vld [vmem:[%s1 + $0x18] sm:$0xff]
    %v28 = vld [vmem:[%s1 + $0x20] sm:$0xff]
    %v29 = vld [vmem:[%s1 + $0x28] sm:$0xff]
    %v30 = vld [vmem:[%s1 + $0x30] sm:$0xff]
    %v31 = vld [vmem:[%s1 + $0x38] sm:$0xff]
    %v32 = vld [vmem:[%s1 + $0x40] sm:$0xff]
    %v33 = vld [vmem:[%s1 + $0x48] sm:$0xff]
    %v34 = vld [vmem:[%s1 + $0x50] sm:$0xff]
    %v35 = vld [vmem:[%s1 + $0x58] sm:$0xff]
    %v36 = vld [vmem:[%s1 + $0x60] sm:$0xff]
    %v37 = vld [vmem:[%s1 + $0x68] sm:$0xff]
    %v38 = vld [vmem:[%s1 + $0x70] sm:$0xff]
    %v39 = vld [vmem:[%s1 + $0x78] sm:$0xff]
    %v40 = vld [vmem:[%s1 + $0x80] sm:$0xff]
    %v41 = vld [vmem:[%s1 + $0x88] sm:$0xff]
    %v42 = vld [vmem:[%s1 + $0x90] sm:$0xff]
    %v43 = vld [vmem:[%s1 + $0x98] sm:$0xff]
    %v44 = vld [vmem:[%s1 + $0xa0] sm:$0xff]
    %v45 = vld [vmem:[%s1 + $0xa8] sm:$0xff]
    %v46 = vld [vmem:[%s1 + $0xb0] sm:$0xff]
    %v47 = vld [vmem:[%s1 + $0xb8] sm:$0xff]
    %v48 = vld [vmem:[%s1 + $0xc0] sm:$0xff]
    %v49 = vld [vmem:[%s1 + $0xc8] sm:$0xff]
    %v50 = vld [vmem:[%s1 + $0xd0] sm:$0xff]
    %v51 = vld [vmem:[%s1 + $0xd8] sm:$0xff]
    %v52 = vld [vmem:[%s1 + $0xe0] sm:$0xff]
    %v53 = vld [vmem:[%s1 + $0xe8] sm:$0xff]
    %v54 = vld [vmem:[%s1 + $0xf0] sm:$0xff]
    %v55 = vld [vmem:[%s1 + $0xf8] sm:$0xff]
    %v56 = vld [vmem:[%s1 + $0x100] sm:$0xff]
    %v57 = vld [vmem:[%s1 + $0x108] sm:$0xff]
    %v58 = vld [vmem:[%s1 + $0x110] sm:$0xff]
    %v59 = vld [vmem:[%s1 + $0x118] sm:$0xff]
    %v60 = vld [vmem:[%s1 + $0x120] sm:$0xff]
    %v61 = vld [vmem:[%s1 + $0x128] sm:$0xff]
    %v62 = vld [vmem:[%s1 + $0x130] sm:$0xff]
    %v63 = vld [vmem:[%s1 + $0x138] sm:$0xff]
    %v64 = vld [vmem:[%s1 + $0x140] sm:$0xff]
    %v65 = vld [vmem:[%s1 + $0x148] sm:$0xff]
    %v66 = vld [vmem:[%s1 + $0x150] sm:$0xff]
    %v67 = vld [vmem:[%s1 + $0x158] sm:$0xff]
    %v68 = vld [vmem:[%s1 + $0x160] sm:$0xff]
    %v69 = vld [vmem:[%s1 + $0x168] sm:$0xff]
    %v70 = vld [vmem:[%s1 + $0x170] sm:$0xff]
    %v71 = vld [vmem:[%s1 + $0x178] sm:$0xff]
    %v72 = vld [vmem:[%s1 + $0x180] sm:$0xff]
    %v73 = vld [vmem:[%s1 + $0x188] sm:$0xff]
    %v74 = vld [vmem:[%s1 + $0x190] sm:$0xff]
    %v75 = vld [vmem:[%s1 + $0x198] sm:$0xff]
    %v76 = vld [vmem:[%s1 + $0x1a0] sm:$0xff]
    %v77 = vld [vmem:[%s1 + $0x1a8] sm:$0xff]
    %v78 = vld [vmem:[%s1 + $0x1b0] sm:$0xff]
    %v79 = vld [vmem:[%s1 + $0x1b8] sm:$0xff]
    %v80 = vld [vmem:[%s1 + $0x1c0] sm:$0xff]
    %v81 = vld [vmem:[%s1 + $0x1c8] sm:$0xff]
    %v82 = vld [vmem:[%s1 + $0x1d0] sm:$0xff]
    %v83 = vld [vmem:[%s1 + $0x1d8] sm:$0xff]
    %v84 = vld [vmem:[%s1 + $0x1e0] sm:$0xff]
    %v85 = vld [vmem:[%s1 + $0x1e8] sm:$0xff]
    %v86 = vld [vmem:[%s1 + $0x1f0] sm:$0xff]
    %v87 = vld [vmem:[%s1 + $0x1f8] sm:$0xff]
    %s88 = sld [smem:[#allocation2]]
    %v89 = vstv %s88
    %v90 = vrcp.pop %v89
    %s91 = vtos %v90
    %v92 = vmax.f32 %v24, 1e-06
    %v93 = vmax.f32 %v25, 1e-06
    %v94 = vmax.f32 %v26, 1e-06
    %v95 = vmax.f32 %v27, 1e-06
    %v96 = vmax.f32 %v28, 1e-06
    %v97 = vmax.f32 %v29, 1e-06
    %v98 = vmax.f32 %v30, 1e-06
    %v99 = vmax.f32 %v31, 1e-06
    %v100 = vmax.f32 %v56, 1e-06
    %v101 = vmax.f32 %v57, 1e-06
    %v102 = vmax.f32 %v58, 1e-06
    %v103 = vmax.f32 %v59, 1e-06
    %v104 = vmax.f32 %v60, 1e-06
    %v105 = vmax.f32 %v61, 1e-06
    %v106 = vmax.f32 %v62, 1e-06
    %v107 = vmax.f32 %v63, 1e-06
    %v108 = vstv %s88
    %v109 = vpow.f32 %v92, %v108
    %v110 = vpow.f32 %v93, %v108
    %v111 = vpow.f32 %v94, %v108
    %v112 = vpow.f32 %v95, %v108
    %v113 = vpow.f32 %v96, %v108
    %v114 = vpow.f32 %v97, %v108
    %v115 = vpow.f32 %v98, %v108
    %v116 = vpow.f32 %v99, %v108
    %v117 = vpow.f32 %v100, %v108
    %v118 = vpow.f32 %v101, %v108
    %v119 = vpow.f32 %v102, %v108
    %v120 = vpow.f32 %v103, %v108
    %v121 = vpow.f32 %v104, %v108
    %v122 = vpow.f32 %v105, %v108
    %v123 = vpow.f32 %v106, %v108
    %v124 = vpow.f32 %v107, %v108
    %vm125 = vcmask 31744
    %v126 = vsel %vm125, %v109, 0.0
    %v127 = vsel %vm125, %v110, 0.0
    %v128 = vadd.f32 %v126, %v127
    %v129 = vsel %vm125, %v111, 0.0
    %v130 = vadd.f32 %v128, %v129
    %v131 = vsel %vm125, %v112, 0.0
    %v132 = vadd.f32 %v130, %v131
    %v133 = vsel %vm125, %v113, 0.0
    %v134 = vadd.f32 %v132, %v133
    %v135 = vsel %vm125, %v114, 0.0
    %v136 = vadd.f32 %v134, %v135
    %v137 = vsel %vm125, %v115, 0.0
    %v138 = vadd.f32 %v136, %v137
    %v139 = vsel %vm125, %v116, 0.0
    %v140 = vadd.f32 %v138, %v139
    %v141 = vrot.slane %v140, 4
    %v142 = vadd.f32 %v140, %v141
    %v143 = vrot.slane %v142, 2
    %v144 = vadd.f32 %v142, %v143
    %v145 = vrot.slane %v144, 1
    %v146 = vadd.f32 %v144, %v145
    %v147 = vsel %vm125, %v117, 0.0
    %v148 = vsel %vm125, %v118, 0.0
    %v149 = vadd.f32 %v147, %v148
    %v150 = vsel %vm125, %v119, 0.0
    %v151 = vadd.f32 %v149, %v150
    %v152 = vsel %vm125, %v120, 0.0
    %v153 = vadd.f32 %v151, %v152
    %v154 = vsel %vm125, %v121, 0.0
    %v155 = vadd.f32 %v153, %v154
    %v156 = vsel %vm125, %v122, 0.0
    %v157 = vadd.f32 %v155, %v156
    %v158 = vsel %vm125, %v123, 0.0
    %v159 = vadd.f32 %v157, %v158
    %v160 = vsel %vm125, %v124, 0.0
    %v161 = vadd.f32 %v159, %v160
    %v162 = vrot.slane %v161, 4
    %v163 = vadd.f32 %v161, %v162
    %v164 = vrot.slane %v163, 2
    %v165 = vadd.f32 %v163, %v164
    %v166 = vrot.slane %v165, 1
    %v167 = vadd.f32 %v165, %v166
    %v168 = vmul.f32 %v146, 0.015625
    %v169 = vmul.f32 %v167, 0.015625
    %v170 = vstv %s91
    %v171 = vpow.f32 %v168, %v170
    %v172 = vpow.f32 %v169, %v170
    %vm173 = vcmask 24576
    %174 = vst.msk [vmem:[%s2] sm:$0x1] %vm173, %v171
    %175 = vst.msk [vmem:[%s2 + $0x4] sm:$0x1] %vm173, %v172
    %s176 = sld [smem:[#allocation2 + $0x1]]
    %v177 = vstv %s176
    %v178 = vrcp.pop %v177
    %s179 = vtos %v178
    %v180 = vmax.f32 %v32, 1e-06
    %v181 = vmax.f32 %v33, 1e-06
    %v182 = vmax.f32 %v34, 1e-06
    %v183 = vmax.f32 %v35, 1e-06
    %v184 = vmax.f32 %v36, 1e-06
    %v185 = vmax.f32 %v37, 1e-06
    %v186 = vmax.f32 %v38, 1e-06
    %v187 = vmax.f32 %v39, 1e-06
    %v188 = vmax.f32 %v64, 1e-06
    %v189 = vmax.f32 %v65, 1e-06
    %v190 = vmax.f32 %v66, 1e-06
    %v191 = vmax.f32 %v67, 1e-06
    %v192 = vmax.f32 %v68, 1e-06
    %v193 = vmax.f32 %v69, 1e-06
    %v194 = vmax.f32 %v70, 1e-06
    %v195 = vmax.f32 %v71, 1e-06
    %v196 = vstv %s176
    %v197 = vpow.f32 %v180, %v196
    %v198 = vpow.f32 %v181, %v196
    %v199 = vpow.f32 %v182, %v196
    %v200 = vpow.f32 %v183, %v196
    %v201 = vpow.f32 %v184, %v196
    %v202 = vpow.f32 %v185, %v196
    %v203 = vpow.f32 %v186, %v196
    %v204 = vpow.f32 %v187, %v196
    %v205 = vpow.f32 %v188, %v196
    %v206 = vpow.f32 %v189, %v196
    %v207 = vpow.f32 %v190, %v196
    %v208 = vpow.f32 %v191, %v196
    %v209 = vpow.f32 %v192, %v196
    %v210 = vpow.f32 %v193, %v196
    %v211 = vpow.f32 %v194, %v196
    %v212 = vpow.f32 %v195, %v196
    %v213 = vsel %vm125, %v197, 0.0
    %v214 = vsel %vm125, %v198, 0.0
    %v215 = vadd.f32 %v213, %v214
    %v216 = vsel %vm125, %v199, 0.0
    %v217 = vadd.f32 %v215, %v216
    %v218 = vsel %vm125, %v200, 0.0
    %v219 = vadd.f32 %v217, %v218
    %v220 = vsel %vm125, %v201, 0.0
    %v221 = vadd.f32 %v219, %v220
    %v222 = vsel %vm125, %v202, 0.0
    %v223 = vadd.f32 %v221, %v222
    %v224 = vsel %vm125, %v203, 0.0
    %v225 = vadd.f32 %v223, %v224
    %v226 = vsel %vm125, %v204, 0.0
    %v227 = vadd.f32 %v225, %v226
    %v228 = vrot.slane %v227, 4
    %v229 = vadd.f32 %v227, %v228
    %v230 = vrot.slane %v229, 2
    %v231 = vadd.f32 %v229, %v230
    %v232 = vrot.slane %v231, 1
    %v233 = vadd.f32 %v231, %v232
    %v234 = vsel %vm125, %v205, 0.0
    %v235 = vsel %vm125, %v206, 0.0
    %v236 = vadd.f32 %v234, %v235
    %v237 = vsel %vm125, %v207, 0.0
    %v238 = vadd.f32 %v236, %v237
    %v239 = vsel %vm125, %v208, 0.0
    %v240 = vadd.f32 %v238, %v239
    %v241 = vsel %vm125, %v209, 0.0
    %v242 = vadd.f32 %v240, %v241
    %v243 = vsel %vm125, %v210, 0.0
    %v244 = vadd.f32 %v242, %v243
    %v245 = vsel %vm125, %v211, 0.0
    %v246 = vadd.f32 %v244, %v245
    %v247 = vsel %vm125, %v212, 0.0
    %v248 = vadd.f32 %v246, %v247
    %v249 = vrot.slane %v248, 4
    %v250 = vadd.f32 %v248, %v249
    %v251 = vrot.slane %v250, 2
    %v252 = vadd.f32 %v250, %v251
    %v253 = vrot.slane %v252, 1
    %v254 = vadd.f32 %v252, %v253
    %v255 = vmul.f32 %v233, 0.015625
    %v256 = vmul.f32 %v254, 0.015625
    %v257 = vstv %s179
    %v258 = vpow.f32 %v255, %v257
    %v259 = vpow.f32 %v256, %v257
    %260 = vst.msk [vmem:[%s2 + $0x1] sm:$0x1] %vm173, %v258
    %261 = vst.msk [vmem:[%s2 + $0x5] sm:$0x1] %vm173, %v259
    %s262 = sld [smem:[#allocation2 + $0x2]]
    %v263 = vstv %s262
    %v264 = vrcp.pop %v263
    %s265 = vtos %v264
    %v266 = vmax.f32 %v40, 1e-06
    %v267 = vmax.f32 %v41, 1e-06
    %v268 = vmax.f32 %v42, 1e-06
    %v269 = vmax.f32 %v43, 1e-06
    %v270 = vmax.f32 %v44, 1e-06
    %v271 = vmax.f32 %v45, 1e-06
    %v272 = vmax.f32 %v46, 1e-06
    %v273 = vmax.f32 %v47, 1e-06
    %v274 = vmax.f32 %v48, 1e-06
    %v275 = vmax.f32 %v49, 1e-06
    %v276 = vmax.f32 %v50, 1e-06
    %v277 = vmax.f32 %v51, 1e-06
    %v278 = vmax.f32 %v52, 1e-06
    %v279 = vmax.f32 %v53, 1e-06
    %v280 = vmax.f32 %v54, 1e-06
    %v281 = vmax.f32 %v55, 1e-06
    %v282 = vmax.f32 %v72, 1e-06
    %v283 = vmax.f32 %v73, 1e-06
    %v284 = vmax.f32 %v74, 1e-06
    %v285 = vmax.f32 %v75, 1e-06
    %v286 = vmax.f32 %v76, 1e-06
    %v287 = vmax.f32 %v77, 1e-06
    %v288 = vmax.f32 %v78, 1e-06
    %v289 = vmax.f32 %v79, 1e-06
    %v290 = vmax.f32 %v80, 1e-06
    %v291 = vmax.f32 %v81, 1e-06
    %v292 = vmax.f32 %v82, 1e-06
    %v293 = vmax.f32 %v83, 1e-06
    %v294 = vmax.f32 %v84, 1e-06
    %v295 = vmax.f32 %v85, 1e-06
    %v296 = vmax.f32 %v86, 1e-06
    %v297 = vmax.f32 %v87, 1e-06
    %v298 = vstv %s262
    %v299 = vpow.f32 %v266, %v298
    %v300 = vpow.f32 %v267, %v298
    %v301 = vpow.f32 %v268, %v298
    %v302 = vpow.f32 %v269, %v298
    %v303 = vpow.f32 %v270, %v298
    %v304 = vpow.f32 %v271, %v298
    %v305 = vpow.f32 %v272, %v298
    %v306 = vpow.f32 %v273, %v298
    %v307 = vpow.f32 %v274, %v298
    %v308 = vpow.f32 %v275, %v298
    %v309 = vpow.f32 %v276, %v298
    %v310 = vpow.f32 %v277, %v298
    %v311 = vpow.f32 %v278, %v298
    %v312 = vpow.f32 %v279, %v298
    %v313 = vpow.f32 %v280, %v298
    %v314 = vpow.f32 %v281, %v298
    %v315 = vpow.f32 %v282, %v298
    %v316 = vpow.f32 %v283, %v298
    %v317 = vpow.f32 %v284, %v298
    %v318 = vpow.f32 %v285, %v298
    %v319 = vpow.f32 %v286, %v298
    %v320 = vpow.f32 %v287, %v298
    %v321 = vpow.f32 %v288, %v298
    %v322 = vpow.f32 %v289, %v298
    %v323 = vpow.f32 %v290, %v298
    %v324 = vpow.f32 %v291, %v298
    %v325 = vpow.f32 %v292, %v298
    %v326 = vpow.f32 %v293, %v298
    %v327 = vpow.f32 %v294, %v298
    %v328 = vpow.f32 %v295, %v298
    %v329 = vpow.f32 %v296, %v298
    %v330 = vpow.f32 %v297, %v298
    %v331 = vsel %vm125, %v299, 0.0
    %v332 = vsel %vm125, %v300, 0.0
    %v333 = vadd.f32 %v331, %v332
    %v334 = vsel %vm125, %v301, 0.0
    %v335 = vadd.f32 %v333, %v334
    %v336 = vsel %vm125, %v302, 0.0
    %v337 = vadd.f32 %v335, %v336
    %v338 = vsel %vm125, %v303, 0.0
    %v339 = vadd.f32 %v337, %v338
    %v340 = vsel %vm125, %v304, 0.0
    %v341 = vadd.f32 %v339, %v340
    %v342 = vsel %vm125, %v305, 0.0
    %v343 = vadd.f32 %v341, %v342
    %v344 = vsel %vm125, %v306, 0.0
    %v345 = vadd.f32 %v343, %v344
    %v346 = vsel %vm125, %v307, 0.0
    %v347 = vadd.f32 %v345, %v346
    %v348 = vsel %vm125, %v308, 0.0
    %v349 = vadd.f32 %v347, %v348
    %v350 = vsel %vm125, %v309, 0.0
    %v351 = vadd.f32 %v349, %v350
    %v352 = vsel %vm125, %v310, 0.0
    %v353 = vadd.f32 %v351, %v352
    %v354 = vsel %vm125, %v311, 0.0
    %v355 = vadd.f32 %v353, %v354
    %v356 = vsel %vm125, %v312, 0.0
    %v357 = vadd.f32 %v355, %v356
    %v358 = vsel %vm125, %v313, 0.0
    %v359 = vadd.f32 %v357, %v358
    %v360 = vsel %vm125, %v314, 0.0
    %v361 = vadd.f32 %v359, %v360
    %v362 = vrot.slane %v361, 4
    %v363 = vadd.f32 %v361, %v362
    %v364 = vrot.slane %v363, 2
    %v365 = vadd.f32 %v363, %v364
    %v366 = vrot.slane %v365, 1
    %v367 = vadd.f32 %v365, %v366
    %v368 = vsel %vm125, %v315, 0.0
    %v369 = vsel %vm125, %v316, 0.0
    %v370 = vadd.f32 %v368, %v369
    %v371 = vsel %vm125, %v317, 0.0
    %v372 = vadd.f32 %v370, %v371
    %v373 = vsel %vm125, %v318, 0.0
    %v374 = vadd.f32 %v372, %v373
    %v375 = vsel %vm125, %v319, 0.0
    %v376 = vadd.f32 %v374, %v375
    %v377 = vsel %vm125, %v320, 0.0
    %v378 = vadd.f32 %v376, %v377
    %v379 = vsel %vm125, %v321, 0.0
    %v380 = vadd.f32 %v378, %v379
    %v381 = vsel %vm125, %v322, 0.0
    %v382 = vadd.f32 %v380, %v381
    %v383 = vsel %vm125, %v323, 0.0
    %v384 = vadd.f32 %v382, %v383
    %v385 = vsel %vm125, %v324, 0.0
    %v386 = vadd.f32 %v384, %v385
    %v387 = vsel %vm125, %v325, 0.0
    %v388 = vadd.f32 %v386, %v387
    %v389 = vsel %vm125, %v326, 0.0
    %v390 = vadd.f32 %v388, %v389
    %v391 = vsel %vm125, %v327, 0.0
    %v392 = vadd.f32 %v390, %v391
    %v393 = vsel %vm125, %v328, 0.0
    %v394 = vadd.f32 %v392, %v393
    %v395 = vsel %vm125, %v329, 0.0
    %v396 = vadd.f32 %v394, %v395
    %v397 = vsel %vm125, %v330, 0.0
    %v398 = vadd.f32 %v396, %v397
    %v399 = vrot.slane %v398, 4
    %v400 = vadd.f32 %v398, %v399
    %v401 = vrot.slane %v400, 2
    %v402 = vadd.f32 %v400, %v401
    %v403 = vrot.slane %v402, 1
    %v404 = vadd.f32 %v402, %v403
    %v405 = vmul.f32 %v367, 0.0078125
    %v406 = vmul.f32 %v404, 0.0078125
    %v407 = vstv %s265
    %v408 = vpow.f32 %v405, %v407
    %v409 = vpow.f32 %v406, %v407
    %410 = vst.msk [vmem:[%s2 + $0x2] sm:$0x1] %vm173, %v408
    %411 = vst.msk [vmem:[%s2 + $0x6] sm:$0x1] %vm173, %v409
    // Predicated region
    $region14: #{tpu_custom_call.1} parent=1 // pred_check
      _
    $region15: #{tpu_custom_call.1} parent=1 // pred_check_branch
      %413 = sbr.rel (0) target = $region17
    $region16: #{tpu_custom_call.1} parent=1 // pred_region
      _
    $region17: #{tpu_custom_call.1} parent=1 // pred_fallthru
      _
    // Predicated region
    $region18: #{tpu_custom_call.1} parent=1 // pred_check
      _
    $region19: #{tpu_custom_call.1} parent=1 // pred_check_branch
      %415 = sbr.rel (0) target = $region21
    $region20: #{tpu_custom_call.1} parent=1 // pred_region
      _
    $region21: #{tpu_custom_call.1} parent=1 // pred_fallthru
      _
    %416 = vsyncpa [#allocation3], 1

</llo_original>
